<compile_context>
chip_gen: v7x
topology: tpu7x:2x2x1
jax: 0.10.0
libtpu: 0.0.40
codegen_flags: <defaults>
</compile_context>

<pallas_src>
import functools

import jax
import jax.numpy as jnp
from jax import lax
from jax.experimental import pallas as pl
from jax.experimental.pallas import tpu as pltpu

GAMMA = 2.0
ALPHA = 0.25

_LANES = 128
_MAX_TILE_ROWS = 2048  # 1 MiB per f32 input tile; fits every generation's VMEM.


def _round_up(x, m):
    return ((x + m - 1) // m) * m


def _focal_loss_kernel(
    x_ref,
    t_ref,
    out_ref,
    acc_ref,
    *,
    gamma,
    alpha,
    inv_n,
    n_full_rows,
    rem_lanes,
    num_full_blocks,
    blocks_per_partial,
    has_ragged,
    binary_target,
):
    p = pl.program_id(0)  # partial-sum index ("parallel" axis, megacore split)
    j = pl.program_id(1)  # reduction step within this partial ("arbitrary")

    @pl.when(j == 0)
    def _():
        acc_ref[...] = jnp.zeros_like(acc_ref)

    x = x_ref[...].astype(jnp.float32)
    t = t_ref[...].astype(jnp.float32)

    if binary_target:
        # Binary {0,1} targets: z = +x (t=1) / -x (t=0); then
        #   logpt = softplus(-z),  pt = sigmoid(z),  1-pt = sigmoid(-z).
        # Costs exp + log1p + reciprocal instead of exp + log1p + exp.
        z = jnp.where(t > 0.5, x, -x)
        e = jnp.exp(-jnp.abs(z))
        logpt = jnp.maximum(-z, 0.0) + jnp.log1p(e)
        denom = 1.0 + e
        inv = pl.reciprocal(denom, approx=True)
        inv = inv * (2.0 - denom * inv)  # one Newton step (pure VALU, ~exact)
        nonneg = z >= 0.0
        pt = jnp.where(nonneg, 1.0, e) * inv
        one_minus_pt = jnp.where(nonneg, e, 1.0) * inv
    else:
        # General (possibly soft) targets: exact BCE-with-logits formulation.
        logpt = jnp.maximum(x, 0.0) - x * t + jnp.log1p(jnp.exp(-jnp.abs(x)))
        pt = jnp.exp(-logpt)
        one_minus_pt = 1.0 - pt

    if gamma == 2.0:
        # Square on the VPU instead of pow (no extra EUP ops, NaN-safe).
        focal_term = one_minus_pt * one_minus_pt
    else:
        # Guard against pow of a (garbage/rounded) negative base -> NaN.
        focal_term = jnp.maximum(one_minus_pt, 0.0) ** gamma
    loss = focal_term * logpt
    if alpha != 0:
        loss = loss * (alpha * t + (1.0 - alpha) * (1.0 - t))

    def _accumulate(vals):
        # (tile_rows,128) -> (tile_rows/8, 8, 128); the leading-axis sum is
        # pure vreg-wise VPU adds into the single-vreg accumulator.
        acc_ref[...] += vals.reshape(-1, 8, _LANES).sum(axis=0)

    if has_ragged:
        global_block = p * blocks_per_partial + j
        needs_mask = global_block >= num_full_blocks

        @pl.when(jnp.logical_not(needs_mask))
        def _():
            _accumulate(loss)

        @pl.when(needs_mask)
        def _():
            rows, lanes = loss.shape
            local_row = lax.broadcasted_iota(jnp.int32, (rows, lanes), 0)
            lane_idx = lax.broadcasted_iota(jnp.int32, (rows, lanes), 1)
            # Row-based comparison: values stay ~total_n/128, no i32 overflow.
            global_row = global_block * rows + local_row
            valid = global_row < n_full_rows
            if rem_lanes:
                valid = jnp.logical_or(
                    valid,
                    jnp.logical_and(global_row == n_full_rows,
                                    lane_idx < rem_lanes),
                )
            _accumulate(jnp.where(valid, loss, 0.0))
    else:
        _accumulate(loss)

    # Single cross-lane/sublane reduce per partial; 1/N folded in here.
    @pl.when(j == pl.num_programs(1) - 1)
    def _():
        out_ref[...] = (jnp.sum(acc_ref[...]) * inv_n).reshape(1, 1)


def focal_loss(logits, target, gamma=GAMMA, alpha=ALPHA,
               max_tile_rows=_MAX_TILE_ROWS):
    """Mean focal loss over all elements; matches the PyTorch module semantics."""
    assert logits.shape == target.shape
    total_n = int(logits.size)
    assert total_n > 0

    # Integer / bool targets are guaranteed binary -> cheaper EUP path.
    binary_target = (jnp.issubdtype(target.dtype, jnp.integer)
                     or target.dtype == jnp.bool_)

    # Flatten only; keep native HBM dtypes (kernel casts to f32 in VMEM).
    flat_x = logits.reshape(-1)
    flat_t = target.reshape(-1)

    rem_lanes = total_n % _LANES
    if rem_lanes:
        # Rare fallback: pad only the sub-128 lane remainder (<=127 elements),
        # never to the tile boundary; the in-kernel mask zeroes the pad.
        pad = _LANES - rem_lanes
        flat_x = jnp.pad(flat_x, (0, pad))
        flat_t = jnp.pad(flat_t, (0, pad))
    rows = flat_x.size // _LANES
    x2d = flat_x.reshape(rows, _LANES)
    t2d = flat_t.reshape(rows, _LANES)

    # Row tile: multiple of the native sublane packing of the narrowest input
    # dtype (8 for 32-bit, 16 for 16-bit, 32 for 8-bit/bool), so blocks stay
    # layout-friendly and the (8,128)-vreg accumulator reshape is exact.
    min_itemsize = min(int(x2d.dtype.itemsize), int(t2d.dtype.itemsize))
    row_align = max(8, 32 // min_itemsize)
    tile_rows = min(_round_up(max_tile_rows, row_align),
                    _round_up(rows, row_align))

    num_blocks = pl.cdiv(rows, tile_rows)          # unpadded grid sizing
    num_partials = 2 if num_blocks >= 2 else 1     # v7x: both TCs stream HBM
    blocks_per_partial = pl.cdiv(num_blocks, num_partials)
    total_blocks = num_partials * blocks_per_partial

    n_full_rows = total_n // _LANES                # rows with all lanes valid
    num_full_blocks = n_full_rows // tile_rows     # blocks needing no mask
    has_ragged = num_full_blocks < total_blocks

    kernel = functools.partial(
        _focal_loss_kernel,
        gamma=float(gamma),
        alpha=float(alpha),
        inv_n=1.0 / total_n,
        n_full_rows=n_full_rows,
        rem_lanes=rem_lanes,
        num_full_blocks=num_full_blocks,
        blocks_per_partial=blocks_per_partial,
        has_ragged=has_ragged,
        binary_target=binary_target,
    )

    bpp = blocks_per_partial
    last_block = num_blocks - 1
    if total_blocks > num_blocks:
        # Phantom blocks from the 2-way split re-fetch the last real block
        # (clamped index, no OOB / no padded HBM block) and are fully masked.
        def in_map(p, j):
            return (jnp.minimum(p * bpp + j, last_block), 0)
    else:
        def in_map(p, j):
            return (p * bpp + j, 0)

    bytes_in = (int(x2d.size) * int(x2d.dtype.itemsize)
                + int(t2d.size) * int(t2d.dtype.itemsize))
    cost = pl.CostEstimate(
        flops=16 * total_n,
        transcendentals=3 * total_n,
        bytes_accessed=bytes_in + num_partials * 4,
    )

    partials = pl.pallas_call(
        kernel,
        out_shape=jax.ShapeDtypeStruct((num_partials, 1), jnp.float32),
        grid_spec=pltpu.PrefetchScalarGridSpec(
            num_scalar_prefetch=0,
            grid=(num_partials, blocks_per_partial),
            in_specs=[
                pl.BlockSpec((tile_rows, _LANES), in_map),
                pl.BlockSpec((tile_rows, _LANES), in_map),
            ],
            out_specs=pl.BlockSpec((1, 1), lambda p, j: (p, 0)),
            scratch_shapes=[pltpu.VMEM((8, _LANES), jnp.float32)],
        ),
        compiler_params=pltpu.CompilerParams(
            dimension_semantics=("parallel", "arbitrary"),
        ),
        cost_estimate=cost,
    )(x2d, t2d)

    # Each partial already carries the 1/N scale; just combine them.
    return jnp.sum(partials)


def _focal_loss_ref(logits, target, gamma=GAMMA, alpha=ALPHA):
    x = logits.astype(jnp.float32)
    t = target.astype(jnp.float32)
    logpt = jnp.maximum(x, 0.0) - x * t + jnp.log1p(jnp.exp(-jnp.abs(x)))
    pt = jnp.exp(-logpt)
    loss = (1.0 - pt) ** gamma * logpt
    if alpha != 0:
        loss = loss * (alpha * t + (1.0 - alpha) * (1.0 - t))
    return jnp.mean(loss)


if __name__ == "__main__":
    key = jax.random.PRNGKey(0)
    k1, k2, k3, k4 = jax.random.split(key, 4)

    # 1) NCHW float logits + float binary targets (general soft-target path,
    #    single full block, no masking).
    logits = jax.random.normal(k1, (2, 4, 16, 16), dtype=jnp.float32)
    target = (jax.random.uniform(k2, (2, 4, 16, 16)) > 0.5).astype(jnp.float32)
    out = jax.block_until_ready(focal_loss(logits, target))
    ref = _focal_loss_ref(logits, target)
    assert jnp.allclose(out, ref, atol=1e-5, rtol=1e-5), (out, ref)

    # 2) int8 binary targets: narrow HBM stream + sigmoid-specialized path.
    logits_i = jax.random.normal(k3, (2, 4, 32, 32), dtype=jnp.float32)
    target_i = (jax.random.uniform(k4, (2, 4, 32, 32)) > 0.5).astype(jnp.int8)
    out_i = jax.block_until_ready(focal_loss(logits_i, target_i))
    ref_i = _focal_loss_ref(logits_i, target_i.astype(jnp.float32))
    assert jnp.allclose(out_i, ref_i, atol=1e-5, rtol=1e-5), (out_i, ref_i)

    # 3) Ragged size (not a multiple of 128): lane-remainder mask path.
    k5, k6 = jax.random.split(k3)
    logits_r = jax.random.normal(k5, (2, 4, 5, 25), dtype=jnp.float32)
    target_r = (jax.random.uniform(k6, (2, 4, 5, 25)) > 0.5).astype(jnp.float32)
    out_r = jax.block_until_ready(focal_loss(logits_r, target_r))
    ref_r = _focal_loss_ref(logits_r, target_r)
    assert jnp.allclose(out_r, ref_r, atol=1e-5, rtol=1e-5), (out_r, ref_r)

    # 4) Small tiles forcing multi-block + 2-way partial split + one phantom
    #    block (exercises the clamped index_map and full-block masking).
    k7, k8 = jax.random.split(k4)
    logits_m = jax.random.normal(k7, (2, 4, 8, 80), dtype=jnp.float32)
    target_m = (jax.random.uniform(k8, (2, 4, 8, 80)) > 0.5).astype(jnp.float32)
    out_m = jax.block_until_ready(focal_loss(logits_m, target_m, max_tile_rows=8))
    ref_m = _focal_loss_ref(logits_m, target_m)
    assert jnp.allclose(out_m, ref_m, atol=1e-5, rtol=1e-5), (out_m, ref_m)

    print("KERNEL_OK")
</pallas_src>

<mosaic_0001>
module attributes {stable_mosaic.version = 11 : i64} {
  func.func @_focal_loss_kernel(%arg0: i32, %arg1: i32, %arg2: memref<16x128xf32, #tpu.memory_space<vmem>>, %arg3: memref<16x128xf32, #tpu.memory_space<vmem>>, %arg4: memref<1x1xf32, #tpu.memory_space<vmem>>, %arg5: memref<8x128xf32, #tpu.memory_space<vmem>>) attributes {dimension_semantics = [#tpu.dimension_semantics<parallel>, #tpu.dimension_semantics<arbitrary>], iteration_bounds = array<i64: 1, 1>, scalar_prefetch = 0 : i64, scratch_operands = 1 : i64, tpu.core_type = #tpu.core_type<tc>, window_params = [{transform_indices = @transform_0, window_bounds = array<i64: 16, 128>}, {transform_indices = @transform_1, window_bounds = array<i64: 16, 128>}, {transform_indices = @transform_2, window_bounds = array<i64: 1, 1>}]} {
    %c0_i32 = arith.constant 0 : i32
    %0 = arith.cmpi eq, %arg1, %c0_i32 : i32
    %1 = arith.extui %0 : i1 to i32
    %c0_i32_0 = arith.constant 0 : i32
    %2 = arith.cmpi ne, %1, %c0_i32_0 : i32
    scf.if %2 {
      %cst_17 = arith.constant 0.000000e+00 : f32
      %38 = vector.broadcast %cst_17 : f32 to vector<8x128xf32>
      %c0_18 = arith.constant 0 : index
      %c0_19 = arith.constant 0 : index
      %39 = vector.load %arg5[%c0_18, %c0_19] : memref<8x128xf32, #tpu.memory_space<vmem>>, vector<8x128xf32>
      tpu.vector_store %arg5[%c0_18, %c0_19], %38 {strides = array<i32>} : memref<8x128xf32, #tpu.memory_space<vmem>>, vector<8x128xf32>,
    } else {
    }
    %c0 = arith.constant 0 : index
    %c0_1 = arith.constant 0 : index
    %3 = vector.load %arg2[%c0, %c0_1] : memref<16x128xf32, #tpu.memory_space<vmem>>, vector<16x128xf32>
    %c0_2 = arith.constant 0 : index
    %c0_3 = arith.constant 0 : index
    %4 = vector.load %arg3[%c0_2, %c0_3] : memref<16x128xf32, #tpu.memory_space<vmem>>, vector<16x128xf32>
    %cst = arith.constant 0.000000e+00 : f32
    %5 = vector.broadcast %cst : f32 to vector<16x128xf32>
    %6 = arith.maximumf %3, %5 : vector<16x128xf32>
    %7 = arith.mulf %3, %4 : vector<16x128xf32>
    %8 = arith.subf %6, %7 : vector<16x128xf32>
    %9 = math.absf %3 : vector<16x128xf32>
    %cst_4 = arith.constant 0.000000e+00 : f32
    %10 = vector.broadcast %cst_4 : f32 to vector<16x128xf32>
    %11 = arith.subf %10, %9 : vector<16x128xf32>
    %12 = math.exp %11 : vector<16x128xf32>
    %13 = math.log1p %12 : vector<16x128xf32>
    %14 = arith.addf %8, %13 : vector<16x128xf32>
    %cst_5 = arith.constant 0.000000e+00 : f32
    %15 = vector.broadcast %cst_5 : f32 to vector<16x128xf32>
    %16 = arith.subf %15, %14 : vector<16x128xf32>
    %17 = math.exp %16 : vector<16x128xf32>
    %cst_6 = arith.constant 1.000000e+00 : f32
    %18 = vector.broadcast %cst_6 : f32 to vector<16x128xf32>
    %19 = arith.subf %18, %17 : vector<16x128xf32>
    %20 = arith.mulf %19, %19 : vector<16x128xf32>
    %21 = arith.mulf %20, %14 : vector<16x128xf32>
    %cst_7 = arith.constant 2.500000e-01 : f32
    %22 = vector.broadcast %cst_7 : f32 to vector<16x128xf32>
    %23 = arith.mulf %22, %4 : vector<16x128xf32>
    %cst_8 = arith.constant 1.000000e+00 : f32
    %24 = vector.broadcast %cst_8 : f32 to vector<16x128xf32>
    %25 = arith.subf %24, %4 : vector<16x128xf32>
    %cst_9 = arith.constant 7.500000e-01 : f32
    %26 = vector.broadcast %cst_9 : f32 to vector<16x128xf32>
    %27 = arith.mulf %26, %25 : vector<16x128xf32>
    %28 = arith.addf %23, %27 : vector<16x128xf32>
    %29 = arith.mulf %21, %28 : vector<16x128xf32>
    %c0_10 = arith.constant 0 : index
    %c0_11 = arith.constant 0 : index
    %30 = vector.load %arg5[%c0_10, %c0_11] : memref<8x128xf32, #tpu.memory_space<vmem>>, vector<8x128xf32>
    %31 = vector.shape_cast %29 : vector<16x128xf32> to vector<2x8x128xf32>
    %cst_12 = arith.constant dense<0.000000e+00> : vector<8x128xf32>
    %32 = vector.multi_reduction <add>, %31, %cst_12 [0] : vector<2x8x128xf32> to vector<8x128xf32>
    %33 = arith.addf %30, %32 : vector<8x128xf32>
    %c0_13 = arith.constant 0 : index
    %c0_14 = arith.constant 0 : index
    %34 = vector.load %arg5[%c0_13, %c0_14] : memref<8x128xf32, #tpu.memory_space<vmem>>, vector<8x128xf32>
    tpu.vector_store %arg5[%c0_13, %c0_14], %33 {strides = array<i32>} : memref<8x128xf32, #tpu.memory_space<vmem>>, vector<8x128xf32>,
    %c0_i32_15 = arith.constant 0 : i32
    %35 = arith.cmpi eq, %arg1, %c0_i32_15 : i32
    %36 = arith.extui %35 : i1 to i32
    %c0_i32_16 = arith.constant 0 : i32
    %37 = arith.cmpi ne, %36, %c0_i32_16 : i32
    scf.if %37 {
      %c0_17 = arith.constant 0 : index
      %c0_18 = arith.constant 0 : index
      %38 = vector.load %arg5[%c0_17, %c0_18] : memref<8x128xf32, #tpu.memory_space<vmem>>, vector<8x128xf32>
      %39 = vector.shape_cast %38 : vector<8x128xf32> to vector<1x8x128xf32>
      %cst_19 = arith.constant dense<0.000000e+00> : vector<1xf32>
      %40 = vector.multi_reduction <add>, %39, %cst_19 [1, 2] : vector<1x8x128xf32> to vector<1xf32>
      %41 = vector.shape_cast %40 : vector<1xf32> to vector<1x1x1xf32>
      %42 = vector.extract %41[0, 0, 0] : f32 from vector<1x1x1xf32>
      %cst_20 = arith.constant 4.8828125E-4 : f32
      %43 = arith.mulf %42, %cst_20 : f32
      %44 = vector.broadcast %43 : f32 to vector<1x1xf32>
      %c0_21 = arith.constant 0 : index
      %c0_22 = arith.constant 0 : index
      %45 = vector.load %arg4[%c0_21, %c0_22] : memref<1x1xf32, #tpu.memory_space<vmem>>, vector<1x1xf32>
      tpu.vector_store %arg4[%c0_21, %c0_22], %44 {strides = array<i32>} : memref<1x1xf32, #tpu.memory_space<vmem>>, vector<1x1xf32>,
    } else {
    }
    return
  }
  func.func @transform_0(%arg0: i32, %arg1: i32) -> (i32, i32) {
    %c1_i32 = arith.constant 1 : i32
    %0 = arith.muli %arg0, %c1_i32 : i32
    %1 = arith.addi %0, %arg1 : i32
    %c0_i32 = arith.constant 0 : i32
    %c0_i32_0 = arith.constant 0 : i32
    return %1, %c0_i32 : i32, i32
  }
  func.func @transform_1(%arg0: i32, %arg1: i32) -> (i32, i32) {
    %c1_i32 = arith.constant 1 : i32
    %0 = arith.muli %arg0, %c1_i32 : i32
    %1 = arith.addi %0, %arg1 : i32
    %c0_i32 = arith.constant 0 : i32
    %c0_i32_0 = arith.constant 0 : i32
    return %1, %c0_i32 : i32, i32
  }
  func.func @transform_2(%arg0: i32, %arg1: i32) -> (i32, i32) {
    %c0_i32 = arith.constant 0 : i32
    %c0_i32_0 = arith.constant 0 : i32
    return %arg0, %c0_i32 : i32, i32
  }
}

</mosaic_0001>

<llo_original>
// kernel: tpu_custom_call.1
$region0: #{tpu_custom_call.1}
  #allocation0 [shape = 'u32[]', space=smem, size = 0x4, offset = 0x4, fixed_abs, tag = 'smem constant byte address 0x4 - core index']
  #allocation1 [shape = 'u32[144,128]{1,0:T(1,128)}', space=vmem, size = 0x12000, scoped, tag = 'internal scratch']
  #allocation2 [shape = 'f32[8,128]{1,0:T(8,128)}', space=vmem, size = 0x1000, scoped, tag = 'scratch operand']
  %s0 = inlined_call_operand.hbm [shape: f32[16,128], index: 0, kind: input, shape index: {}]
  %s1 = inlined_call_operand.hbm [shape: f32[16,128], index: 1, kind: input, shape index: {}]
  %s2 = inlined_call_operand.hbm [shape: f32[1,1], index: 2, kind: output, shape index: {}]
  %s3 = sld [smem:[#allocation0]]
  $region34: #{tpu_custom_call.1} parent=0
    _
  %s5 = ssub.s32 1, %s3
  %s6 = scalar_select 0, %s5, %s3
  $region1: #{tpu_custom_call.1} parent=0
    #allocation3 [shape = 'u8[8192]{0}', space=vmem, size = 0x2000, scoped, tag = 'input window, operand 0, single buffered']
    #allocation4 [shape = 's32[1]{0}', space=sflag, size = 0x4, scoped, tag = 'scoped memory for tpu_custom_call.1']
    #allocation5 [shape = 's32[1]{0}', space=sflag, size = 0x4, scoped, tag = 'scoped memory for tpu_custom_call.1']
    #allocation6 [shape = 'u8[8192]{0}', space=vmem, size = 0x2000, scoped, tag = 'input window, operand 1, single buffered']
    #allocation7 [shape = 's32[1]{0}', space=sflag, size = 0x4, scoped, tag = 'scoped memory for tpu_custom_call.1']
    #allocation8 [shape = 'u8[512]{0}', space=vmem, size = 0x400, scoped, tag = 'output window, operand 0, single buffered']
    %7 = vsyncpa [#allocation4], 0
    %8 = vsyncpa [#allocation7], 0
    %9 = vsyncpa [#allocation5], 0
    // Predicated region
    $region2: #{tpu_custom_call.1} parent=1 // pred_check
      _
    $region3: #{tpu_custom_call.1} parent=1 // pred_check_branch
      %11 = sbr.rel (0) target = $region5
    $region4: #{tpu_custom_call.1} parent=1 // pred_region
      %s12 = sadd.s32 0, 0
      %s13 = smul.u32 2, %s12
      %s15 = ssub.s32 256, 256
      %16 = vsyncadd [#allocation4], %s15
      %s17 = smul.addr %s13, 128
      %s18 = scalar_lea.hbm %s0, %s17
      %s19 = sshll.u32 [#allocation3], 4
      %s20 = int_to_ptr.vmem [resolvable:$true] %s19
      %25 = dma.hbm_to_vmem [thread:$0]  %s18, 256, %s20, [#allocation4], 128, 128, 8
    $region5: #{tpu_custom_call.1} parent=1 // pred_fallthru
      _
    // Predicated region
    $region6: #{tpu_custom_call.1} parent=1 // pred_check
      _
    $region7: #{tpu_custom_call.1} parent=1 // pred_check_branch
      %27 = sbr.rel (0) target = $region9
    $region8: #{tpu_custom_call.1} parent=1 // pred_region
      %s28 = sadd.s32 0, 0
      %s29 = smul.u32 2, %s28
      %s31 = ssub.s32 256, 256
      %32 = vsyncadd [#allocation7], %s31
      %s33 = smul.addr %s29, 128
      %s34 = scalar_lea.hbm %s1, %s33
      %s35 = sshll.u32 [#allocation6], 4
      %s36 = int_to_ptr.vmem [resolvable:$true] %s35
      %41 = dma.hbm_to_vmem [thread:$0]  %s34, 256, %s36, [#allocation7], 128, 128, 8
    $region9: #{tpu_custom_call.1} parent=1 // pred_fallthru
      _
    // Predicated region
    $region10: #{tpu_custom_call.1} parent=1 // pred_check
      _
    $region11: #{tpu_custom_call.1} parent=1 // pred_check_branch
      %43 = sbr.rel (0) target = $region13
    $region12: #{tpu_custom_call.1} parent=1 // pred_region
      %44 = dma.done [#allocation4], 256
    $region13: #{tpu_custom_call.1} parent=1 // pred_fallthru
      _
    // Predicated region
    $region14: #{tpu_custom_call.1} parent=1 // pred_check
      _
    $region15: #{tpu_custom_call.1} parent=1 // pred_check_branch
      %46 = sbr.rel (0) target = $region17
    $region16: #{tpu_custom_call.1} parent=1 // pred_region
      %47 = dma.done [#allocation7], 256
    $region17: #{tpu_custom_call.1} parent=1 // pred_fallthru
      _
    %s48 = sadd.s32 0, 0
    %s49 = smul.u32 2, %s48
    %s50 = sadd.s32 0, 0
    %s51 = smul.u32 2, %s50
    %p52 = scmp.eq.s32.totalorder 0, 0
    // Predicated region
    $region18: #{tpu_custom_call.1} parent=1 // pred_check
      %p53 = pneg %p52
    $region19: #{tpu_custom_call.1} parent=1 // pred_check_branch
      %55 = sbr.rel (%p53) target = $region21
    $region20: #{tpu_custom_call.1} parent=1 // pred_region
      %56 = vst [vmem:[#allocation2] sm:$0xff] 0.0
    $region21: #{tpu_custom_call.1} parent=1 // pred_fallthru
      _
    %v57 = vld [vmem:[#allocation3] sm:$0xff]
    %v58 = vld [vmem:[#allocation3 + $0x8] sm:$0xff]
    %v59 = vld [vmem:[#allocation6] sm:$0xff]
    %v60 = vld [vmem:[#allocation6 + $0x8] sm:$0xff]
    %v61 = vmax.f32 %v57, 0.0
    %v62 = vmax.f32 %v58, 0.0
    %v63 = vmul.f32 %v57, %v59
    %v64 = vmul.f32 %v58, %v60
    %v65 = vsub.f32 %v61, %v63
    %v66 = vsub.f32 %v62, %v64
    %v67 = vand.u32 2147483647, %v57
    %v68 = vand.u32 2147483647, %v58
    %v69 = vsub.f32 0.0, %v67
    %v70 = vsub.f32 0.0, %v68
    %v71 = vmul.f32 %v69, 1.442695
    %v72 = vpow.pop %v71
    %v73 = vmul.f32 %v70, 1.442695
    %v74 = vpow.pop %v73
    %v75 = vadd.f32 %v72, 1.0
    %v76 = vlog2.pop %v75
    %v77 = vmul.f32 %v76, 0.6931472
    %v78 = vmul.f32 -0.5, %v72
    %v79 = vadd.f32 %v78, 1.0
    %v80 = vmul.f32 %v79, %v72
    %v81 = vand.u32 2147483647, %v72
    %vm82 = vcmp.lt.f32.partialorder %v81, 0.0004427343
    %v83 = vsel %vm82, %v80, %v77
    %v84 = vadd.f32 %v74, 1.0
    %v85 = vlog2.pop %v84
    %v86 = vmul.f32 %v85, 0.6931472
    %v87 = vmul.f32 -0.5, %v74
    %v88 = vadd.f32 %v87, 1.0
    %v89 = vmul.f32 %v88, %v74
    %v90 = vand.u32 2147483647, %v74
    %vm91 = vcmp.lt.f32.partialorder %v90, 0.0004427343
    %v92 = vsel %vm91, %v89, %v86
    %v93 = vadd.f32 %v65, %v83
    %v94 = vadd.f32 %v66, %v92
    %v95 = vsub.f32 0.0, %v93
    %v96 = vsub.f32 0.0, %v94
    %v97 = vmul.f32 %v95, 1.442695
    %v98 = vpow.pop %v97
    %v99 = vmul.f32 %v96, 1.442695
    %v100 = vpow.pop %v99
    %v101 = vsub.f32 1.0, %v98
    %v102 = vsub.f32 1.0, %v100
    %v103 = vmul.f32 %v101, %v101
    %v104 = vmul.f32 %v102, %v102
    %v105 = vmul.f32 %v103, %v93
    %v106 = vmul.f32 %v104, %v94
    %v107 = vmul.f32 %v59, 0.25
    %v108 = vmul.f32 %v60, 0.25
    %v109 = vsub.f32 1.0, %v59
    %v110 = vsub.f32 1.0, %v60
    %v111 = vmul.f32 %v109, 0.75
    %v112 = vmul.f32 %v110, 0.75
    %v113 = vadd.f32 %v107, %v111
    %v114 = vadd.f32 %v108, %v112
    %v115 = vmul.f32 %v105, %v113
    %v116 = vmul.f32 %v106, %v114
    %v117 = vld [vmem:[#allocation2] sm:$0xff]
    %v118 = vadd.f32 %v115, %v116
    %v119 = vadd.f32 %v117, %v118
    %120 = vst [vmem:[#allocation2] sm:$0xff] %v119
    // Predicated region
    $region22: #{tpu_custom_call.1} parent=1 // pred_check
      %p121 = pneg %p52
    $region23: #{tpu_custom_call.1} parent=1 // pred_check_branch
      %123 = sbr.rel (%p121) target = $region25
    $region24: #{tpu_custom_call.1} parent=1 // pred_region
      %v124 = vld [vmem:[#allocation2] sm:$0xff]
      %125 = vadd.xlane.f32.xlu0 %v124
      %v126 = vpop.xlane.xlu0 %125
      %v127 = vrot.slane %v126, 4
      %v128 = vadd.f32 %v126, %v127
      %v129 = vrot.slane %v128, 2
      %v130 = vadd.f32 %v128, %v129
      %v131 = vrot.slane %v130, 1
      %v132 = vadd.f32 %v130, %v131
      %s133 = vtos %v132
      %s134 = smul.f32 %s133, 0.00048828125
      %v135 = vstv %s134
      %vm136 = vcmask 0
      %137 = vst.msk [vmem:[#allocation8] sm:$0x1] %vm136, %v135
    $region25: #{tpu_custom_call.1} parent=1 // pred_fallthru
      _
    // Predicated region
    $region26: #{tpu_custom_call.1} parent=1 // pred_check
      _
    $region27: #{tpu_custom_call.1} parent=1 // pred_check_branch
      %139 = sbr.rel (0) target = $region29
    $region28: #{tpu_custom_call.1} parent=1 // pred_region
      %s141 = ssub.s32 16, 16
      %142 = vsyncadd [#allocation5], %s141
      %s144 = sshll.u32 [#allocation8], 4
      %s145 = int_to_ptr.vmem [resolvable:$true] %s144
      %147 = dma.vmem_to_hbm [thread:$0]  %s145, 16, %s2, [#allocation5]
    $region29: #{tpu_custom_call.1} parent=1 // pred_fallthru
      _
    // Predicated region
    $region30: #{tpu_custom_call.1} parent=1 // pred_check
      _
    $region31: #{tpu_custom_call.1} parent=1 // pred_check_branch
      %149 = sbr.rel (0) target = $region33
    $region32: #{tpu_custom_call.1} parent=1 // pred_region
      %150 = dma.done [#allocation5], 16
    $region33: #{tpu_custom_call.1} parent=1 // pred_fallthru
      _
    %151 = vsyncpa [#allocation4], 1
    %152 = vsyncpa [#allocation7], 1
    %153 = vsyncpa [#allocation5], 1

</llo_original>
